<compile_context>
chip_gen: v7x
topology: tpu7x:2x2x1
jax: 0.10.0
libtpu: 0.0.40
codegen_flags: <defaults>
</compile_context>

<pallas_src>
import functools

import jax
import jax.numpy as jnp
from jax import lax
from jax.experimental import pallas as pl
from jax.experimental.pallas import tpu as pltpu

ALPHA = 0.1
EPSILON = 1e-8
NUM_CLASSES = 10
NUM_ORTHOG_CLASSES = 5
TILE_N = 8192  # feature-axis tile: 256 KiB per f32 buffer at B=8


# ----------------------------------------------------------------------------
# Base loss: mean cross entropy over the batch (tiny, one grid point).
# ----------------------------------------------------------------------------
def _cross_entropy_kernel(logits_ref, onehot_ref, out_ref):
    x = logits_ref[...].astype(jnp.float32)                      # (B, C)
    oh = onehot_ref[...].astype(jnp.float32)                     # (B, C)
    m = jnp.max(x, axis=-1, keepdims=True)
    lse = m + jnp.log(jnp.sum(jnp.exp(x - m), axis=-1, keepdims=True))
    nll = lse - jnp.sum(oh * x, axis=-1, keepdims=True)          # (B, 1)
    out_ref[...] = jnp.mean(nll, keepdims=True)                  # (1, 1)


# ----------------------------------------------------------------------------
# Per-layer streaming kernel: one feature tile -> (1, B, B) Gram of the
# column-normalized activations.  Contraction over the tile width (full MXU
# depth); independent output block per tile (parallel / megacore friendly).
# ----------------------------------------------------------------------------
def _layer_gram_kernel(acts_ref, gram_ref, *, n_true, needs_mask, eps):
    a = acts_ref[...].astype(jnp.float32)                        # (B, bn)
    bsz, bn = a.shape
    if needs_mask:
        # Ragged tail of the last tile: zero out-of-range columns.  Zeroed
        # columns have mean 0 and centered value exactly 0, so they normalize
        # to 0 and contribute nothing to the Gram.
        cols = pl.program_id(0) * bn + lax.broadcasted_iota(
            jnp.int32, (1, bn), 1)
        a = jnp.where(cols < n_true, a, 0.0)

    # One-pass per-column moments (unbiased std, torch.std default).
    s1 = jnp.sum(a, axis=0, keepdims=True)                       # (1, bn)
    s2 = jnp.sum(a * a, axis=0, keepdims=True)                   # (1, bn)
    mean = s1 * (1.0 / bsz)
    var = jnp.maximum(s2 - bsz * mean * mean, 0.0) * (1.0 / (bsz - 1))
    inv_std = 1.0 / (jnp.sqrt(var) + eps)                        # exact divide (1 row)
    a_norm = (a - mean) * inv_std                                # (B, bn)

    # Gram over the feature axis: (B, bn) x (B, bn) -> (B, B), K = bn.
    gram = lax.dot_general(a_norm, a_norm,
                           dimension_numbers=(((1,), (1,)), ((), ())),
                           preferred_element_type=jnp.float32)
    gram_ref[...] = gram[None]                                   # (1, B, B)


def _layer_gram(act_flat, *, eps, tile_n=TILE_N):
    """Sum of per-tile normalized-activation Grams for one layer -> (B, B)."""
    B, N = act_flat.shape
    block_n = N if N <= tile_n else tile_n      # full dim or 128-aligned tile
    num_tiles = pl.cdiv(N, block_n)
    needs_mask = (N % block_n) != 0
    grams = pl.pallas_call(
        functools.partial(_layer_gram_kernel, n_true=N,
                          needs_mask=needs_mask, eps=eps),
        grid=(num_tiles,),
        out_shape=jax.ShapeDtypeStruct((num_tiles, B, B), jnp.float32),
        in_specs=[pl.BlockSpec((B, block_n), lambda j: (0, j))],
        out_specs=pl.BlockSpec((1, B, B), lambda j: (j, 0, 0)),
        compiler_params=pltpu.CompilerParams(
            dimension_semantics=("parallel",)),
    )(act_flat)
    return jnp.sum(grams, axis=0)


# ----------------------------------------------------------------------------
# CorrelationPenaltyLoss.forward equivalent
# ----------------------------------------------------------------------------
def correlation_penalty_loss(output, desired_labels, orthogonal_labels,
                             activations, *, num_classes=NUM_CLASSES,
                             num_orthog_classes=NUM_ORTHOG_CLASSES,
                             one_hot=True, alpha=ALPHA, epsilon=EPSILON,
                             tile_n=TILE_N):
    B = output.shape[0]
    assert B >= 2, "unbiased std (ddof=1) requires batch >= 2"

    # Base loss kernel (logits kept in native dtype; upcast in-kernel).
    onehot = jax.nn.one_hot(desired_labels, num_classes, dtype=jnp.float32)
    vmem = pl.BlockSpec(memory_space=pltpu.MemorySpace.VMEM)
    base_loss = pl.pallas_call(
        _cross_entropy_kernel,
        out_shape=jax.ShapeDtypeStruct((1, 1), jnp.float32),
        in_specs=[vmem, vmem],
        out_specs=vmem,
    )(output, onehot)[0, 0]

    # Orthogonal-label normalization + Gram: only (B, K), plain JAX, exact math.
    if one_hot:
        if num_orthog_classes is None:
            raise ValueError("num_orthog_classes must be specified for one-hot.")
        orth = jax.nn.one_hot(orthogonal_labels, num_orthog_classes,
                              dtype=jnp.float32)
    else:
        orth = orthogonal_labels.reshape(B, -1).astype(jnp.float32)
    l_ctr = orth - jnp.mean(orth, axis=0, keepdims=True)
    l_std = jnp.sqrt(jnp.sum(l_ctr * l_ctr, axis=0, keepdims=True) / (B - 1))
    l_norm = l_ctr / (l_std + epsilon)
    gl = l_norm @ l_norm.T                                        # (B, B)

    # Per-layer penalty: stream each layer through the tiled Gram kernel.
    bm1 = jnp.float32(B - 1)
    penalty = jnp.float32(0.0)
    num_layers = len(activations)
    for act in activations.values():
        a = act.reshape(B, -1)                       # native dtype, no upcast
        n = a.shape[1]
        ga = _layer_gram(a, eps=epsilon, tile_n=tile_n)           # (B, B)
        sumsq = jnp.sum(ga * gl)          # == ||A_norm^T L_norm||_F^2
        fro = jnp.sqrt(jnp.maximum(sumsq, 0.0)) / bm1             # ||corr||_F
        penalty = penalty + fro / n
    if num_layers > 0:
        penalty = penalty / num_layers
    return base_loss + alpha * penalty


# ----------------------------------------------------------------------------
# Toy model (glue): Conv2d (NCHW) -> ReLU -> flatten -> Linear.  The forward
# hooks of the PyTorch module would capture the Conv2d and Linear outputs;
# we return them explicitly as the `activations` dict.
# ----------------------------------------------------------------------------
def init_model_params(key):
    k1, k2, k3, k4 = jax.random.split(key, 4)
    conv_w = jax.random.normal(k1, (8, 4, 3, 3), jnp.float32) * 0.1     # OIHW
    conv_b = jax.random.normal(k2, (8,), jnp.float32) * 0.1
    fc_w = jax.random.normal(k3, (NUM_CLASSES, 8 * 16 * 16), jnp.float32) * 0.02
    fc_b = jax.random.normal(k4, (NUM_CLASSES,), jnp.float32) * 0.02
    return dict(conv_w=conv_w, conv_b=conv_b, fc_w=fc_w, fc_b=fc_b)


def model_forward(params, x):
    # x: (B, 4, 16, 16) NCHW
    conv_out = lax.conv_general_dilated(
        x, params["conv_w"], window_strides=(1, 1), padding="SAME",
        dimension_numbers=("NCHW", "OIHW", "NCHW"))
    conv_out = conv_out + params["conv_b"][None, :, None, None]
    hidden = jax.nn.relu(conv_out)
    flat = hidden.reshape(x.shape[0], -1)
    logits = flat @ params["fc_w"].T + params["fc_b"]
    activations = {"conv1": conv_out, "fc": logits}   # "forward hook" captures
    return logits, activations


# ----------------------------------------------------------------------------
# Pure-JAX reference (mirrors the PyTorch math) for validation
# ----------------------------------------------------------------------------
def reference_loss(output, desired_labels, orthogonal_labels, activations):
    onehot = jax.nn.one_hot(desired_labels, NUM_CLASSES, dtype=jnp.float32)
    logp = jax.nn.log_softmax(output.astype(jnp.float32), axis=-1)
    base = -jnp.mean(jnp.sum(onehot * logp, axis=-1))
    B = output.shape[0]
    orth = jax.nn.one_hot(orthogonal_labels, NUM_ORTHOG_CLASSES,
                          dtype=jnp.float32)
    on = (orth - orth.mean(0)) / (orth.std(0, ddof=1) + EPSILON)
    pen = 0.0
    for act in activations.values():
        a = act.reshape(B, -1).astype(jnp.float32)
        an = (a - a.mean(0)) / (a.std(0, ddof=1) + EPSILON)
        corr = an.T @ on / (B - 1)
        pen = pen + jnp.sqrt(jnp.sum(corr * corr)) / a.shape[1]
    pen = pen / len(activations)
    return base + ALPHA * pen


if __name__ == "__main__":
    key = jax.random.PRNGKey(0)
    k_param, k_x, k_y, k_o = jax.random.split(key, 4)

    params = init_model_params(k_param)
    x = jax.random.normal(k_x, (8, 4, 16, 16), jnp.float32)        # NCHW input
    desired_labels = jax.random.randint(k_y, (8,), 0, NUM_CLASSES)
    orthogonal_labels = jax.random.randint(k_o, (8,), 0, NUM_ORTHOG_CLASSES)

    output, activations = model_forward(params, x)

    total_loss = correlation_penalty_loss(
        output, desired_labels, orthogonal_labels, activations,
        num_classes=NUM_CLASSES, num_orthog_classes=NUM_ORTHOG_CLASSES,
        one_hot=True, alpha=ALPHA, epsilon=EPSILON)
    total_loss = jax.block_until_ready(total_loss)

    ref = jax.block_until_ready(
        reference_loss(output, desired_labels, orthogonal_labels, activations))
    assert jnp.allclose(total_loss, ref, rtol=1e-3, atol=1e-4), (total_loss, ref)

    print("KERNEL_OK")
</pallas_src>

<mosaic_0001>
module attributes {stable_mosaic.version = 11 : i64} {
  func.func @_cross_entropy_kernel(%arg0: memref<8x10xf32, #tpu.memory_space<vmem>>, %arg1: memref<8x10xf32, #tpu.memory_space<vmem>>, %arg2: memref<1x1xf32, #tpu.memory_space<vmem>>) attributes {dimension_semantics = [], scalar_prefetch = 0 : i64, scratch_operands = 0 : i64, tpu.core_type = #tpu.core_type<tc>} {
    %c0 = arith.constant 0 : index
    %c0_0 = arith.constant 0 : index
    %0 = vector.load %arg0[%c0, %c0_0] : memref<8x10xf32, #tpu.memory_space<vmem>>, vector<8x10xf32>
    %c0_1 = arith.constant 0 : index
    %c0_2 = arith.constant 0 : index
    %1 = vector.load %arg1[%c0_1, %c0_2] : memref<8x10xf32, #tpu.memory_space<vmem>>, vector<8x10xf32>
    %cst = arith.constant dense<0xFF800000> : vector<8xf32>
    %2 = vector.multi_reduction <maximumf>, %0, %cst [1] : vector<8x10xf32> to vector<8xf32>
    %3 = vector.shape_cast %2 : vector<8xf32> to vector<8x1xf32>
    %4 = vector.broadcast %3 : vector<8x1xf32> to vector<8x10xf32>
    %5 = arith.subf %0, %4 : vector<8x10xf32>
    %6 = math.exp %5 : vector<8x10xf32>
    %cst_3 = arith.constant dense<0.000000e+00> : vector<8xf32>
    %7 = vector.multi_reduction <add>, %6, %cst_3 [1] : vector<8x10xf32> to vector<8xf32>
    %8 = vector.shape_cast %7 : vector<8xf32> to vector<8x1xf32>
    %9 = math.log %8 : vector<8x1xf32>
    %10 = arith.addf %3, %9 : vector<8x1xf32>
    %11 = arith.mulf %1, %0 : vector<8x10xf32>
    %cst_4 = arith.constant dense<0.000000e+00> : vector<8xf32>
    %12 = vector.multi_reduction <add>, %11, %cst_4 [1] : vector<8x10xf32> to vector<8xf32>
    %13 = vector.shape_cast %12 : vector<8xf32> to vector<8x1xf32>
    %14 = arith.subf %10, %13 : vector<8x1xf32>
    %15 = vector.shape_cast %14 : vector<8x1xf32> to vector<1x8x1xf32>
    %cst_5 = arith.constant dense<0.000000e+00> : vector<1xf32>
    %16 = vector.multi_reduction <add>, %15, %cst_5 [1, 2] : vector<1x8x1xf32> to vector<1xf32>
    %17 = vector.shape_cast %16 : vector<1xf32> to vector<1x1x1xf32>
    %18 = vector.extract %17[0, 0, 0] : f32 from vector<1x1x1xf32>
    %19 = vector.broadcast %18 : f32 to vector<1x1xf32>
    %cst_6 = arith.constant 8.000000e+00 : f32
    %20 = vector.broadcast %cst_6 : f32 to vector<1x1xf32>
    %21 = arith.divf %19, %20 : vector<1x1xf32>
    %c0_7 = arith.constant 0 : index
    %c0_8 = arith.constant 0 : index
    %22 = vector.load %arg2[%c0_7, %c0_8] : memref<1x1xf32, #tpu.memory_space<vmem>>, vector<1x1xf32>
    tpu.vector_store %arg2[%c0_7, %c0_8], %21 {strides = array<i32>} : memref<1x1xf32, #tpu.memory_space<vmem>>, vector<1x1xf32>,
    return
  }
}

</mosaic_0001>

<llo_original>
// kernel: tpu_custom_call.1
$region0: #{tpu_custom_call.1}
  #allocation0 [shape = 'u32[]', space=smem, size = 0x4, offset = 0x4, fixed_abs, tag = 'smem constant byte address 0x4 - core index']
  #allocation1 [shape = 'u32[144,128]{1,0:T(1,128)}', space=vmem, size = 0x12000, scoped, tag = 'internal scratch']
  %s0 = inlined_call_operand.hbm [shape: f32[8,10], index: 0, kind: input, shape index: {}]
  %s1 = inlined_call_operand.hbm [shape: f32[8,10], index: 1, kind: input, shape index: {}]
  %s2 = inlined_call_operand.hbm [shape: f32[1,1], index: 2, kind: output, shape index: {}]
  %s3 = sld [smem:[#allocation0]]
  $region26: #{tpu_custom_call.1} parent=0
    _
  %s5 = ssub.s32 1, %s3
  %s6 = scalar_select 0, %s5, %s3
  $region1: #{tpu_custom_call.1} parent=0
    #allocation2 [shape = 'u8[4096]{0}', space=vmem, size = 0x1000, scoped, tag = 'input window, operand 0, single buffered']
    #allocation3 [shape = 's32[1]{0}', space=sflag, size = 0x4, scoped, tag = 'scoped memory for tpu_custom_call.1']
    #allocation4 [shape = 's32[1]{0}', space=sflag, size = 0x4, scoped, tag = 'scoped memory for tpu_custom_call.1']
    #allocation5 [shape = 'u8[4096]{0}', space=vmem, size = 0x1000, scoped, tag = 'input window, operand 1, single buffered']
    #allocation6 [shape = 's32[1]{0}', space=sflag, size = 0x4, scoped, tag = 'scoped memory for tpu_custom_call.1']
    #allocation7 [shape = 'u8[512]{0}', space=vmem, size = 0x400, scoped, tag = 'output window, operand 0, single buffered']
    %7 = vsyncpa [#allocation3], 0
    %8 = vsyncpa [#allocation6], 0
    %9 = vsyncpa [#allocation4], 0
    // Predicated region
    $region2: #{tpu_custom_call.1} parent=1 // pred_check
      _
    $region3: #{tpu_custom_call.1} parent=1 // pred_check_branch
      %11 = sbr.rel (0) target = $region5
    $region4: #{tpu_custom_call.1} parent=1 // pred_region
      %s13 = ssub.s32 128, 128
      %14 = vsyncadd [#allocation3], %s13
      %s16 = sshll.u32 [#allocation2], 4
      %s17 = int_to_ptr.vmem [resolvable:$true] %s16
      %19 = dma.hbm_to_vmem [thread:$0]  %s0, 128, %s17, [#allocation3]
    $region5: #{tpu_custom_call.1} parent=1 // pred_fallthru
      _
    // Predicated region
    $region6: #{tpu_custom_call.1} parent=1 // pred_check
      _
    $region7: #{tpu_custom_call.1} parent=1 // pred_check_branch
      %21 = sbr.rel (0) target = $region9
    $region8: #{tpu_custom_call.1} parent=1 // pred_region
      %s23 = ssub.s32 128, 128
      %24 = vsyncadd [#allocation6], %s23
      %s26 = sshll.u32 [#allocation5], 4
      %s27 = int_to_ptr.vmem [resolvable:$true] %s26
      %29 = dma.hbm_to_vmem [thread:$0]  %s1, 128, %s27, [#allocation6]
    $region9: #{tpu_custom_call.1} parent=1 // pred_fallthru
      _
    // Predicated region
    $region10: #{tpu_custom_call.1} parent=1 // pred_check
      _
    $region11: #{tpu_custom_call.1} parent=1 // pred_check_branch
      %31 = sbr.rel (0) target = $region13
    $region12: #{tpu_custom_call.1} parent=1 // pred_region
      %32 = dma.done [#allocation3], 128
    $region13: #{tpu_custom_call.1} parent=1 // pred_fallthru
      _
    // Predicated region
    $region14: #{tpu_custom_call.1} parent=1 // pred_check
      _
    $region15: #{tpu_custom_call.1} parent=1 // pred_check_branch
      %34 = sbr.rel (0) target = $region17
    $region16: #{tpu_custom_call.1} parent=1 // pred_region
      %35 = dma.done [#allocation6], 128
    $region17: #{tpu_custom_call.1} parent=1 // pred_fallthru
      _
    %v36 = vld [vmem:[#allocation2] sm:$0xff]
    %v37 = vld [vmem:[#allocation5] sm:$0xff]
    %vm38 = vcmask 80896
    %v39 = vsel %vm38, %v36, -inf
    %40 = vmax.xlane.f32.xlu0 %v39
    %v41 = vpop.xlane.xlu0 %40
    %v42 = vsub.f32 %v36, %v41
    %v43 = vmul.f32 %v42, 1.442695
    %v44 = vpow.pop %v43
    %v45 = vsel %vm38, %v44, 0.0
    %46 = vadd.xlane.f32.xlu0 %v45
    %v47 = vpop.xlane.xlu0 %46
    %v48 = vlog2.pop %v47
    %v49 = vmul.f32 %v48, 0.6931472
    %v50 = vadd.f32 %v41, %v49
    %v51 = vmul.f32 %v37, %v36
    %v52 = vsel %vm38, %v51, 0.0
    %53 = vadd.xlane.f32.xlu0 %v52
    %v54 = vpop.xlane.xlu0 %53
    %v55 = vsub.f32 %v50, %v54
    %vm56 = vcmask 7168
    %v57 = vsel %vm56, %v55, 0.0
    %58 = vadd.xlane.f32.xlu0 %v57
    %v59 = vpop.xlane.xlu0 %58
    %v60 = vrot.slane %v59, 4
    %v61 = vadd.f32 %v59, %v60
    %v62 = vrot.slane %v61, 2
    %v63 = vadd.f32 %v61, %v62
    %v64 = vrot.slane %v63, 1
    %v65 = vadd.f32 %v63, %v64
    %s66 = vtos %v65
    %v67 = vstv %s66
    %v68 = vrcp.pop 8.0
    %v69 = vmul.f32 %v67, %v68
    %vm70 = vcmask 0
    %71 = vst.msk [vmem:[#allocation7] sm:$0x1] %vm70, %v69
    // Predicated region
    $region18: #{tpu_custom_call.1} parent=1 // pred_check
      _
    $region19: #{tpu_custom_call.1} parent=1 // pred_check_branch
      %73 = sbr.rel (0) target = $region21
    $region20: #{tpu_custom_call.1} parent=1 // pred_region
      %s75 = ssub.s32 16, 16
      %76 = vsyncadd [#allocation4], %s75
      %s78 = sshll.u32 [#allocation7], 4
      %s79 = int_to_ptr.vmem [resolvable:$true] %s78
      %81 = dma.vmem_to_hbm [thread:$0]  %s79, 16, %s2, [#allocation4]
    $region21: #{tpu_custom_call.1} parent=1 // pred_fallthru
      _
    // Predicated region
    $region22: #{tpu_custom_call.1} parent=1 // pred_check
      _
    $region23: #{tpu_custom_call.1} parent=1 // pred_check_branch
      %83 = sbr.rel (0) target = $region25
    $region24: #{tpu_custom_call.1} parent=1 // pred_region
      %84 = dma.done [#allocation4], 16
    $region25: #{tpu_custom_call.1} parent=1 // pred_fallthru
      _
    %85 = vsyncpa [#allocation3], 1
    %86 = vsyncpa [#allocation6], 1
    %87 = vsyncpa [#allocation4], 1

</llo_original>
